<compile_context>
chip_gen: v7x
topology: tpu7x:2x2x1
jax: 0.10.0
libtpu: 0.0.40
codegen_flags: <defaults>
</compile_context>

<pallas_src>
import functools
import math

import jax
import jax.numpy as jnp
from jax.experimental import pallas as pl
from jax.experimental.pallas import tpu as pltpu

_LANE = 128      # lane width  (last-dim alignment)
_SUBLANE = 8     # f32 sublane (second-to-last dim alignment)
_NEG_SLOPE = 0.01


def _round_up(n: int, m: int) -> int:
    return ((n + m - 1) // m) * m


def _choose_tm(m_p: int) -> int:
    """Batch-tile rows.

    Target 256 (fills the v6e/v7x 256-wide MXU and amortizes the ~0.35 us
    per-grid-step cost); for mid-size batches prefer two ~M/2 tiles so the
    'parallel' batch axis has >= 2 steps for the v7x megacore to split.
    """
    if m_p <= 128:
        return m_p
    if m_p <= 512:
        return _round_up((m_p + 1) // 2, _SUBLANE)
    return 256


def _fcnn_kernel(x_ref, w_in_ref, b_in_ref, w_hid_ref, b_hid_ref,
                 w_out_ref, b_out_ref, o_ref, h_ref, *,
                 num_hidden: int, mxu_dtype):
    """One (batch-tile, layer) grid step.

    Grid axis 0: batch tiles ("parallel", megacore-splittable).
    Grid axis 1: hidden-layer index ("arbitrary"); hidden weights stream one
                 layer per step (double-buffered by the pipeline) while the
                 activation lives in h_ref (VMEM scratch) across the axis.

    x_ref:     (TM, K_p)          w_in_ref:  (K_p, H_p)     b_in_ref:  (1, H_p)
    w_hid_ref: (1, H_p, H_p)      b_hid_ref: (1, 1, H_p)
    w_out_ref: (H_p, N_p)         b_out_ref: (1, N_p)
    o_ref:     (TM, N_p)          h_ref:     (TM, H_p) f32 scratch
    """
    l = pl.program_id(1)

    # Input layer: Linear, NO activation (matches the PyTorch forward).
    @pl.when(l == 0)
    def _():
        h_ref[...] = (
            jnp.dot(x_ref[...].astype(mxu_dtype), w_in_ref[...],
                    preferred_element_type=jnp.float32)
            + b_in_ref[...])

    # Hidden layer l: Linear + LeakyReLU(0.01); bias add / activation in f32.
    if num_hidden > 0:
        y = (jnp.dot(h_ref[...].astype(mxu_dtype), w_hid_ref[0],
                     preferred_element_type=jnp.float32)
             + b_hid_ref[0])
        h_ref[...] = jnp.maximum(y, _NEG_SLOPE * y)

    # Output layer: Linear, NO activation; write only on the last layer step.
    @pl.when(l == pl.num_programs(1) - 1)
    def _():
        y = (jnp.dot(h_ref[...].astype(mxu_dtype), w_out_ref[...],
                     preferred_element_type=jnp.float32)
             + b_out_ref[...])
        o_ref[...] = y.astype(o_ref.dtype)


def pack_fcnn_params(params, use_bf16_matmul: bool = False):
    """Pad + stack parameters ONCE (not per forward call).

    Weights are stored already transposed (in_features, out_features) and
    zero-padded to lane/MXU-aligned shapes.  Zero padding is numerically
    exact through the bias add and LeakyReLU.  Biases stay f32 even when the
    MXU operands are bf16.
    """
    w_in, b_in = params["input"]
    hidden = params["hidden"]
    w_out, b_out = params["output"]

    K, H = w_in.shape
    N = w_out.shape[1]
    L = len(hidden)
    K_p, H_p, N_p = (_round_up(d, _LANE) for d in (K, H, N))

    f32 = jnp.float32
    wdt = jnp.bfloat16 if use_bf16_matmul else f32

    w_in_p = jnp.pad(w_in.astype(f32), ((0, K_p - K), (0, H_p - H))).astype(wdt)
    b_in_p = jnp.pad(b_in.astype(f32), (0, H_p - H)).reshape(1, H_p)
    w_out_p = jnp.pad(w_out.astype(f32), ((0, H_p - H), (0, N_p - N))).astype(wdt)
    b_out_p = jnp.pad(b_out.astype(f32), (0, N_p - N)).reshape(1, N_p)

    if L > 0:
        w_hid = jnp.stack([w for (w, _) in hidden]).astype(f32)
        b_hid = jnp.stack([b for (_, b) in hidden]).astype(f32)
        w_hid_p = jnp.pad(w_hid, ((0, 0), (0, H_p - H), (0, H_p - H))).astype(wdt)
        b_hid_p = jnp.pad(b_hid, ((0, 0), (0, H_p - H))).reshape(L, 1, H_p)
    else:
        # Minimal placeholder; never read by the kernel when num_hidden == 0.
        w_hid_p = jnp.zeros((1, _SUBLANE, _LANE), wdt)
        b_hid_p = jnp.zeros((1, 1, _LANE), f32)

    return dict(w_in=w_in_p, b_in=b_in_p, w_hid=w_hid_p, b_hid=b_hid_p,
                w_out=w_out_p, b_out=b_out_p,
                num_hidden=L, out_features=N)


@functools.partial(jax.jit, static_argnames=("num_hidden", "out_features"))
def _fcnn_forward_impl(x, w_in, b_in, w_hid, b_hid, w_out, b_out, *,
                       num_hidden: int, out_features: int):
    M, K = x.shape
    K_p, H_p = w_in.shape
    N_p = w_out.shape[1]
    L_eff = max(num_hidden, 1)
    mxu_dtype = w_in.dtype
    wb = w_in.dtype.itemsize

    # Batch padding / tiling.
    M_p = _round_up(max(M, _SUBLANE), _SUBLANE)
    TM = _choose_tm(M_p)
    M_p = _round_up(M_p, TM)
    n_tiles = M_p // TM

    # Only x is padded per call (params were padded once at pack time).
    x_p = jnp.pad(x.astype(jnp.float32), ((0, M_p - M), (0, K_p - K)))

    # Real resident VMEM footprint (double-buffered pipeline buffers + scratch).
    hid_w_blk = w_hid.shape[1] * w_hid.shape[2]
    vmem_bytes = (
        2 * TM * K_p * 4                     # x tile
        + 2 * TM * N_p * 4                   # out tile
        + 2 * (K_p * H_p + H_p * N_p) * wb   # W_in / W_out (grid-invariant)
        + 2 * (H_p + N_p) * 4                # b_in / b_out
        + 2 * hid_w_blk * wb                 # streamed hidden-weight block
        + 2 * w_hid.shape[1] * 4             # streamed hidden-bias block
        + TM * H_p * 4)                      # activation scratch
    vmem_limit = int(min(max(vmem_bytes * 3 // 2 + (8 << 20), 32 << 20),
                         128 << 20))

    flops = 2 * M_p * (K_p * H_p + num_hidden * H_p * H_p + H_p * N_p)
    bytes_accessed = (
        4 * M_p * (K_p + N_p)
        + n_tiles * wb * (K_p * H_p + H_p * N_p + L_eff * hid_w_blk)
        + 4 * (H_p + N_p + L_eff * H_p))

    kernel = functools.partial(_fcnn_kernel, num_hidden=num_hidden,
                               mxu_dtype=mxu_dtype)

    out_p = pl.pallas_call(
        kernel,
        out_shape=jax.ShapeDtypeStruct((M_p, N_p), jnp.float32),
        grid=(n_tiles, L_eff),
        in_specs=[
            pl.BlockSpec((TM, K_p), lambda i, l: (i, 0)),    # x (resident over l)
            pl.BlockSpec((K_p, H_p), lambda i, l: (0, 0)),   # W_in (invariant)
            pl.BlockSpec((1, H_p), lambda i, l: (0, 0)),     # b_in
            pl.BlockSpec((1,) + w_hid.shape[1:],             # W_hidden[l] streamed
                         lambda i, l: (l, 0, 0)),
            pl.BlockSpec((1,) + b_hid.shape[1:],             # b_hidden[l] streamed
                         lambda i, l: (l, 0, 0)),
            pl.BlockSpec((H_p, N_p), lambda i, l: (0, 0)),   # W_out (invariant)
            pl.BlockSpec((1, N_p), lambda i, l: (0, 0)),     # b_out
        ],
        out_specs=pl.BlockSpec((TM, N_p), lambda i, l: (i, 0)),
        scratch_shapes=[pltpu.VMEM((TM, H_p), jnp.float32)],
        compiler_params=pltpu.CompilerParams(
            dimension_semantics=("parallel", "arbitrary"),
            vmem_limit_bytes=vmem_limit),
        cost_estimate=pl.CostEstimate(flops=flops, transcendentals=0,
                                      bytes_accessed=bytes_accessed),
    )(x_p, w_in, b_in, w_hid, b_hid, w_out, b_out)

    return out_p[:M, :out_features]


def fcnn_forward(packed, x: jax.Array) -> jax.Array:
    """FCNN.forward on packed (padded/stacked) parameters. Jitted end-to-end."""
    return _fcnn_forward_impl(
        x, packed["w_in"], packed["b_in"], packed["w_hid"], packed["b_hid"],
        packed["w_out"], packed["b_out"],
        num_hidden=packed["num_hidden"], out_features=packed["out_features"])


def init_linear_params(key, in_features: int, out_features: int):
    """Mimics PyTorch nn.Linear default init (uniform +-1/sqrt(fan_in))."""
    k_w, k_b = jax.random.split(key)
    bound = 1.0 / math.sqrt(in_features)
    # Stored already transposed: (in_features, out_features), so y = x @ W + b.
    w = jax.random.uniform(k_w, (in_features, out_features),
                           minval=-bound, maxval=bound, dtype=jnp.float32)
    b = jax.random.uniform(k_b, (out_features,),
                           minval=-bound, maxval=bound, dtype=jnp.float32)
    return w, b


def init_fcnn_params(key, input_size: int, hidden_size: int,
                     output_size: int, num_hidden_layers: int):
    keys = jax.random.split(key, num_hidden_layers + 2)
    return {
        "input": init_linear_params(keys[0], input_size, hidden_size),
        "hidden": [
            init_linear_params(keys[1 + i], hidden_size, hidden_size)
            for i in range(num_hidden_layers)
        ],
        "output": init_linear_params(keys[-1], hidden_size, output_size),
    }


def fcnn_reference(params, x: jax.Array) -> jax.Array:
    """Pure-JAX reference (f32) for correctness checking."""
    w_in, b_in = params["input"]
    x = x @ w_in + b_in
    for (w_h, b_h) in params["hidden"]:
        y = x @ w_h + b_h
        x = jnp.where(y > 0, y, _NEG_SLOPE * y)
    w_out, b_out = params["output"]
    return x @ w_out + b_out


if __name__ == "__main__":
    # Small, deterministic configuration (matches the PyTorch module's forward).
    batch = 2
    input_size = 16
    hidden_size = 32
    output_size = 8
    num_hidden_layers = 2

    root = jax.random.PRNGKey(0)
    k_params, k_x = jax.random.split(root)

    params = init_fcnn_params(k_params, input_size, hidden_size,
                              output_size, num_hidden_layers)
    x = jax.random.normal(k_x, (batch, input_size), dtype=jnp.float32)
    ref = fcnn_reference(params, x)

    # Exact f32 path (matches the PyTorch f32 module).
    packed_f32 = pack_fcnn_params(params, use_bf16_matmul=False)
    out = jax.block_until_ready(fcnn_forward(packed_f32, x))
    assert out.shape == (batch, output_size)
    assert jnp.allclose(out, ref, atol=1e-5, rtol=1e-5), "f32 mismatch vs reference"

    # bf16 MXU operands / f32 accumulation (v6e/v7x fast path) — relaxed tol.
    packed_bf16 = pack_fcnn_params(params, use_bf16_matmul=True)
    out_bf16 = jax.block_until_ready(fcnn_forward(packed_bf16, x))
    assert out_bf16.shape == (batch, output_size)
    assert jnp.allclose(out_bf16, ref, atol=5e-2, rtol=5e-2), "bf16 mismatch vs reference"

    print("KERNEL_OK")
</pallas_src>

<mosaic_0001>
module attributes {stable_mosaic.version = 11 : i64} {
  func.func @_fcnn_kernel(%arg0: i32, %arg1: i32, %arg2: memref<8x128xf32, #tpu.memory_space<vmem>>, %arg3: memref<128x128xf32, #tpu.memory_space<vmem>>, %arg4: memref<1x128xf32, #tpu.memory_space<vmem>>, %arg5: memref<1x128x128xf32, #tpu.memory_space<vmem>>, %arg6: memref<1x1x128xf32, #tpu.memory_space<vmem>>, %arg7: memref<128x128xf32, #tpu.memory_space<vmem>>, %arg8: memref<1x128xf32, #tpu.memory_space<vmem>>, %arg9: memref<8x128xf32, #tpu.memory_space<vmem>>, %arg10: memref<8x128xf32, #tpu.memory_space<vmem>>) attributes {dimension_semantics = [#tpu.dimension_semantics<parallel>, #tpu.dimension_semantics<arbitrary>], iteration_bounds = array<i64: 1, 2>, scalar_prefetch = 0 : i64, scratch_operands = 1 : i64, tpu.core_type = #tpu.core_type<tc>, window_params = [{transform_indices = @transform_0, window_bounds = array<i64: 8, 128>}, {pipeline_mode = #tpu.pipeline_mode<synchronous>, transform_indices = @transform_1, window_bounds = array<i64: 128, 128>}, {pipeline_mode = #tpu.pipeline_mode<synchronous>, transform_indices = @transform_2, window_bounds = array<i64: 1, 128>}, {transform_indices = @transform_3, window_bounds = array<i64: 1, 128, 128>}, {transform_indices = @transform_4, window_bounds = array<i64: 1, 1, 128>}, {pipeline_mode = #tpu.pipeline_mode<synchronous>, transform_indices = @transform_5, window_bounds = array<i64: 128, 128>}, {pipeline_mode = #tpu.pipeline_mode<synchronous>, transform_indices = @transform_6, window_bounds = array<i64: 1, 128>}, {transform_indices = @transform_7, window_bounds = array<i64: 8, 128>}]} {
    %c0_i32 = arith.constant 0 : i32
    %0 = arith.cmpi eq, %arg1, %c0_i32 : i32
    %1 = arith.extui %0 : i1 to i32
    %c0_i32_0 = arith.constant 0 : i32
    %2 = arith.cmpi ne, %1, %c0_i32_0 : i32
    scf.if %2 {
      %c0_12 = arith.constant 0 : index
      %c0_13 = arith.constant 0 : index
      %18 = vector.load %arg2[%c0_12, %c0_13] : memref<8x128xf32, #tpu.memory_space<vmem>>, vector<8x128xf32>
      %c0_14 = arith.constant 0 : index
      %c0_15 = arith.constant 0 : index
      %19 = vector.load %arg3[%c0_14, %c0_15] : memref<128x128xf32, #tpu.memory_space<vmem>>, vector<128x128xf32>
      %cst_16 = arith.constant dense<0.000000e+00> : vector<8x128xf32>
      %20 = tpu.matmul %18, %19, %cst_16 {dimension_numbers = #tpu.dot_dimension_numbers<[1], [0], [0], [1], [0, 0, 1, 1], [], []>} : vector<8x128xf32>, vector<128x128xf32>, vector<8x128xf32> -> vector<8x128xf32>
      %c0_17 = arith.constant 0 : index
      %c0_18 = arith.constant 0 : index
      %21 = vector.load %arg4[%c0_17, %c0_18] : memref<1x128xf32, #tpu.memory_space<vmem>>, vector<1x128xf32>
      %22 = vector.broadcast %21 : vector<1x128xf32> to vector<8x128xf32>
      %23 = arith.addf %20, %22 : vector<8x128xf32>
      %c0_19 = arith.constant 0 : index
      %c0_20 = arith.constant 0 : index
      %24 = vector.load %arg10[%c0_19, %c0_20] : memref<8x128xf32, #tpu.memory_space<vmem>>, vector<8x128xf32>
      tpu.vector_store %arg10[%c0_19, %c0_20], %23 {strides = array<i32>} : memref<8x128xf32, #tpu.memory_space<vmem>>, vector<8x128xf32>,
    } else {
    }
    %c0 = arith.constant 0 : index
    %c0_1 = arith.constant 0 : index
    %3 = vector.load %arg10[%c0, %c0_1] : memref<8x128xf32, #tpu.memory_space<vmem>>, vector<8x128xf32>
    %c0_2 = arith.constant 0 : index
    %c0_3 = arith.constant 0 : index
    %c0_4 = arith.constant 0 : index
    %4 = vector.load %arg5[%c0_2, %c0_3, %c0_4] : memref<1x128x128xf32, #tpu.memory_space<vmem>>, vector<1x128x128xf32>
    %5 = vector.shape_cast %4 : vector<1x128x128xf32> to vector<128x128xf32>
    %cst = arith.constant dense<0.000000e+00> : vector<8x128xf32>
    %6 = tpu.matmul %3, %5, %cst {dimension_numbers = #tpu.dot_dimension_numbers<[1], [0], [0], [1], [0, 0, 1, 1], [], []>} : vector<8x128xf32>, vector<128x128xf32>, vector<8x128xf32> -> vector<8x128xf32>
    %c0_5 = arith.constant 0 : index
    %c0_6 = arith.constant 0 : index
    %c0_7 = arith.constant 0 : index
    %7 = vector.load %arg6[%c0_5, %c0_6, %c0_7] : memref<1x1x128xf32, #tpu.memory_space<vmem>>, vector<1x1x128xf32>
    %8 = vector.shape_cast %7 : vector<1x1x128xf32> to vector<1x128xf32>
    %9 = vector.broadcast %8 : vector<1x128xf32> to vector<8x128xf32>
    %10 = arith.addf %6, %9 : vector<8x128xf32>
    %cst_8 = arith.constant 0.00999999977 : f32
    %11 = vector.broadcast %cst_8 : f32 to vector<8x128xf32>
    %12 = arith.mulf %11, %10 : vector<8x128xf32>
    %13 = arith.maximumf %10, %12 : vector<8x128xf32>
    %c0_9 = arith.constant 0 : index
    %c0_10 = arith.constant 0 : index
    %14 = vector.load %arg10[%c0_9, %c0_10] : memref<8x128xf32, #tpu.memory_space<vmem>>, vector<8x128xf32>
    tpu.vector_store %arg10[%c0_9, %c0_10], %13 {strides = array<i32>} : memref<8x128xf32, #tpu.memory_space<vmem>>, vector<8x128xf32>,
    %c1_i32 = arith.constant 1 : i32
    %15 = arith.cmpi eq, %arg1, %c1_i32 : i32
    %16 = arith.extui %15 : i1 to i32
    %c0_i32_11 = arith.constant 0 : i32
    %17 = arith.cmpi ne, %16, %c0_i32_11 : i32
    scf.if %17 {
      %c0_12 = arith.constant 0 : index
      %c0_13 = arith.constant 0 : index
      %18 = vector.load %arg10[%c0_12, %c0_13] : memref<8x128xf32, #tpu.memory_space<vmem>>, vector<8x128xf32>
      %c0_14 = arith.constant 0 : index
      %c0_15 = arith.constant 0 : index
      %19 = vector.load %arg7[%c0_14, %c0_15] : memref<128x128xf32, #tpu.memory_space<vmem>>, vector<128x128xf32>
      %cst_16 = arith.constant dense<0.000000e+00> : vector<8x128xf32>
      %20 = tpu.matmul %18, %19, %cst_16 {dimension_numbers = #tpu.dot_dimension_numbers<[1], [0], [0], [1], [0, 0, 1, 1], [], []>} : vector<8x128xf32>, vector<128x128xf32>, vector<8x128xf32> -> vector<8x128xf32>
      %c0_17 = arith.constant 0 : index
      %c0_18 = arith.constant 0 : index
      %21 = vector.load %arg8[%c0_17, %c0_18] : memref<1x128xf32, #tpu.memory_space<vmem>>, vector<1x128xf32>
      %22 = vector.broadcast %21 : vector<1x128xf32> to vector<8x128xf32>
      %23 = arith.addf %20, %22 : vector<8x128xf32>
      %c0_19 = arith.constant 0 : index
      %c0_20 = arith.constant 0 : index
      %24 = vector.load %arg9[%c0_19, %c0_20] : memref<8x128xf32, #tpu.memory_space<vmem>>, vector<8x128xf32>
      tpu.vector_store %arg9[%c0_19, %c0_20], %23 {strides = array<i32>} : memref<8x128xf32, #tpu.memory_space<vmem>>, vector<8x128xf32>,
    } else {
    }
    return
  }
  func.func @transform_0(%arg0: i32, %arg1: i32) -> (i32, i32) {
    %c0_i32 = arith.constant 0 : i32
    %c0_i32_0 = arith.constant 0 : i32
    return %arg0, %c0_i32 : i32, i32
  }
  func.func @transform_1(%arg0: i32, %arg1: i32) -> (i32, i32) {
    %c0_i32 = arith.constant 0 : i32
    %c0_i32_0 = arith.constant 0 : i32
    %c0_i32_1 = arith.constant 0 : i32
    return %c0_i32, %c0_i32_0 : i32, i32
  }
  func.func @transform_2(%arg0: i32, %arg1: i32) -> (i32, i32) {
    %c0_i32 = arith.constant 0 : i32
    %c0_i32_0 = arith.constant 0 : i32
    %c0_i32_1 = arith.constant 0 : i32
    return %c0_i32, %c0_i32_0 : i32, i32
  }
  func.func @transform_3(%arg0: i32, %arg1: i32) -> (i32, i32, i32) {
    %c0_i32 = arith.constant 0 : i32
    %c0_i32_0 = arith.constant 0 : i32
    %c0_i32_1 = arith.constant 0 : i32
    return %arg1, %c0_i32, %c0_i32_0 : i32, i32, i32
  }
  func.func @transform_4(%arg0: i32, %arg1: i32) -> (i32, i32, i32) {
    %c0_i32 = arith.constant 0 : i32
    %c0_i32_0 = arith.constant 0 : i32
    %c0_i32_1 = arith.constant 0 : i32
    return %arg1, %c0_i32, %c0_i32_0 : i32, i32, i32
  }
  func.func @transform_5(%arg0: i32, %arg1: i32) -> (i32, i32) {
    %c0_i32 = arith.constant 0 : i32
    %c0_i32_0 = arith.constant 0 : i32
    %c0_i32_1 = arith.constant 0 : i32
    return %c0_i32, %c0_i32_0 : i32, i32
  }
  func.func @transform_6(%arg0: i32, %arg1: i32) -> (i32, i32) {
    %c0_i32 = arith.constant 0 : i32
    %c0_i32_0 = arith.constant 0 : i32
    %c0_i32_1 = arith.constant 0 : i32
    return %c0_i32, %c0_i32_0 : i32, i32
  }
  func.func @transform_7(%arg0: i32, %arg1: i32) -> (i32, i32) {
    %c0_i32 = arith.constant 0 : i32
    %c0_i32_0 = arith.constant 0 : i32
    return %arg0, %c0_i32 : i32, i32
  }
}

</mosaic_0001>

<llo_original>
// kernel: _fcnn_forward_impl.1
$region0: #{_fcnn_forward_impl.1}
  #allocation0 [shape = 'u32[]', space=smem, size = 0x4, offset = 0x4, fixed_abs, tag = 'smem constant byte address 0x4 - core index']
  #allocation1 [shape = 'u32[144,128]{1,0:T(1,128)}', space=vmem, size = 0x12000, scoped, tag = 'internal scratch']
  #allocation2 [shape = 'f32[8,128]{1,0:T(8,128)}', space=vmem, size = 0x1000, scoped, tag = 'scratch operand']
  %s0 = inlined_call_operand.vmem [shape: f32[8,128], index: 0, kind: input, shape index: {}]
  %s1 = inlined_call_operand.hbm [shape: f32[128,128], index: 1, kind: input, shape index: {}]
  %s2 = inlined_call_operand.vmem [shape: f32[1,128], index: 2, kind: input, shape index: {}]
  %s3 = inlined_call_operand.hbm [shape: f32[2,128,128], index: 3, kind: input, shape index: {}]
  %s4 = inlined_call_operand.vmem [shape: f32[2,1,128], index: 4, kind: input, shape index: {}]
  %s5 = inlined_call_operand.hbm [shape: f32[128,128], index: 5, kind: input, shape index: {}]
  %s6 = inlined_call_operand.vmem [shape: f32[1,128], index: 6, kind: input, shape index: {}]
  %s7 = inlined_call_operand.vmem [shape: f32[8,128], index: 7, kind: output, shape index: {}]
  %s8 = sld [smem:[#allocation0]]
  $region81: #{_fcnn_forward_impl.1} parent=0
    _
  %s10 = ssub.s32 1, %s8
  %s11 = scalar_select 0, %s10, %s8
  $region1: #{_fcnn_forward_impl.1} parent=0
    #allocation3 [shape = 'u8[65536]{0}', space=vmem, size = 0x10000, scoped, tag = 'input window, operand 1, single buffered']
    #allocation4 [shape = 's32[2]{0}', space=sflag, size = 0x8, scoped, tag = 'scoped memory for _fcnn_forward_impl.1']
    #allocation5 [shape = 'u8[131072]{0}', space=vmem, size = 0x20000, scoped, tag = 'input window, operand 3']
    #allocation6 [shape = 's32[2]{0}', space=sflag, size = 0x8, scoped, tag = 'scoped memory for _fcnn_forward_impl.1']
    #allocation7 [shape = 'u8[65536]{0}', space=vmem, size = 0x10000, scoped, tag = 'input window, operand 5, single buffered']
    %12 = vsyncpa [#allocation4], 0
    %13 = vsyncpa [#allocation6], 0
    %s14 = scalar_lea.sflag [#allocation6], 1
    %15 = vsyncpa %s14, 0
    loop: start=0, step=1, limit=4
    $region2: #{_fcnn_forward_impl.1} parent=1 // loop_pre_header
      _
    $region3: #{_fcnn_forward_impl.1} parent=1 // loop_header
      %s17 = sphi 0, %s21
      %p18 = scmp.ge.s32.totalorder %s17, 4
      %s24 = sphi 0, %s36
      %s25 = sphi 0, %s32
      %s26 = sphi 0, %s24
      %s27 = sphi 0, %s25
      %s28 = sphi 0, %s26
      %s29 = sphi 0, %s27
      %s39 = sphi 0, %s41
      %s42 = sphi 0, %s39
      %s43 = sphi 0, %s42
      %s59 = sphi 0, %s43
      %s63 = sphi 0, %s63
      %s65 = sphi 0, %s63
      %s66 = sphi 0, %s65
      %s80 = sphi 0, %s66
      %s84 = sphi 0, %s84
      %s86 = sphi 0, %s84
      %s87 = sphi 0, %s86
      %s101 = sphi 0, %s87
      %s107 = sphi 0, %s109
      %s110 = sphi 0, %s107
      %s111 = sphi 0, %s110
      %s127 = sphi 0, %s111
      %s133 = sphi 0, %s135
      %s136 = sphi 0, %s133
      %s137 = sphi 0, %s136
      %s153 = sphi 0, %s137
      %s157 = sphi 0, %s157
      %s159 = sphi 0, %s157
      %s160 = sphi 0, %s159
      %s174 = sphi 0, %s160
      %s178 = sphi 0, %s178
      %s180 = sphi 0, %s178
      %s181 = sphi 0, %s180
      %s195 = sphi 0, %s181
      %s201 = sphi 0, %s203
      %s204 = sphi 0, %s201
      %s205 = sphi 0, %s204
      %s221 = sphi 0, %s205
    $region4: #{_fcnn_forward_impl.1} parent=1 // loop_header_branch
      %20 = sbr.rel (%p18) target = $region8
    $region5: #{_fcnn_forward_impl.1} parent=1 // loop_body
      %s22 = ssub.s32 %s17, 1
      %s23 = ssub.s32 %s17, 2
      %s30 = sadd.s32 1, %s25
      %p31 = scmp.ge.s32.totalorder %s30, 2
      %s32 = scalar_select %p31, 0, %s30
      %s33 = sadd.s32 1, %s24
      %s34 = scalar_select %p31, %s33, %s24
      %p35 = scmp.ge.s32.totalorder %s34, 1
      %s36 = scalar_select %p35, 0, %s34
      %s37 = ssub.s32 %s24, %s36
      %p38 = scmp.eq.s32.totalorder %s37, 0
      %s40 = sadd.s32 %s39, 1
      %s41 = scalar_select %p38, %s39, %s40
      %p44 = pneg %p38
      %p45 = scmp.eq.s32.totalorder %s17, 1
      %p46 = por %p44, %p45
      %p47 = scmp.ne.s32.totalorder %s39, %s42
      %p48 = scmp.eq.s32.totalorder %s17, 0
      %p49 = por %p47, %p48
      %p50 = scmp.ne.s32.totalorder %s39, %s42
      %p51 = scmp.eq.s32.totalorder %s22, 1
      %p52 = por %p50, %p51
      %p53 = scmp.ne.s32.totalorder %s42, %s43
      %p54 = scmp.eq.s32.totalorder %s22, 0
      %p55 = por %p53, %p54
      %p56 = scmp.ne.s32.totalorder %s42, %s43
      %p57 = scmp.eq.s32.totalorder %s23, 1
      %p58 = por %p56, %p57
      %p60 = scmp.ne.s32.totalorder %s43, %s59
      %p61 = scmp.eq.s32.totalorder %s23, 0
      %p62 = por %p60, %p61
      %s64 = sadd.s32 %s63, 1
      %p67 = scmp.eq.s32.totalorder %s17, 1
      %p68 = scmp.ne.s32.totalorder %s63, %s65
      %p69 = scmp.eq.s32.totalorder %s17, 0
      %p70 = por %p68, %p69
      %p71 = scmp.ne.s32.totalorder %s63, %s65
      %p72 = scmp.eq.s32.totalorder %s22, 1
      %p73 = por %p71, %p72
      %p74 = scmp.ne.s32.totalorder %s65, %s66
      %p75 = scmp.eq.s32.totalorder %s22, 0
      %p76 = por %p74, %p75
      %p77 = scmp.ne.s32.totalorder %s65, %s66
      %p78 = scmp.eq.s32.totalorder %s23, 1
      %p79 = por %p77, %p78
      %p81 = scmp.ne.s32.totalorder %s66, %s80
      %p82 = scmp.eq.s32.totalorder %s23, 0
      %p83 = por %p81, %p82
      %s85 = sadd.s32 %s84, 1
      %p88 = scmp.eq.s32.totalorder %s17, 1
      %p89 = scmp.ne.s32.totalorder %s84, %s86
      %p90 = scmp.eq.s32.totalorder %s17, 0
      %p91 = por %p89, %p90
      %p92 = scmp.ne.s32.totalorder %s84, %s86
      %p93 = scmp.eq.s32.totalorder %s22, 1
      %p94 = por %p92, %p93
      %p95 = scmp.ne.s32.totalorder %s86, %s87
      %p96 = scmp.eq.s32.totalorder %s22, 0
      %p97 = por %p95, %p96
      %p98 = scmp.ne.s32.totalorder %s86, %s87
      %p99 = scmp.eq.s32.totalorder %s23, 1
      %p100 = por %p98, %p99
      %p102 = scmp.ne.s32.totalorder %s87, %s101
      %p103 = scmp.eq.s32.totalorder %s23, 0
      %p104 = por %p102, %p103
      %s105 = ssub.s32 %s25, %s32
      %p106 = scmp.eq.s32.totalorder %s105, 0
      %s108 = sadd.s32 %s107, 1
      %s109 = scalar_select %p106, %s107, %s108
      %p112 = pneg %p106
      %p113 = scmp.eq.s32.totalorder %s17, 1
      %p114 = por %p112, %p113
      %p115 = scmp.ne.s32.totalorder %s107, %s110
      %p116 = scmp.eq.s32.totalorder %s17, 0
      %p117 = por %p115, %p116
      %p118 = scmp.ne.s32.totalorder %s107, %s110
      %p119 = scmp.eq.s32.totalorder %s22, 1
      %p120 = por %p118, %p119
      %p121 = scmp.ne.s32.totalorder %s110, %s111
      %p122 = scmp.eq.s32.totalorder %s22, 0
      %p123 = por %p121, %p122
      %p124 = scmp.ne.s32.totalorder %s110, %s111
      %p125 = scmp.eq.s32.totalorder %s23, 1
      %p126 = por %p124, %p125
      %p128 = scmp.ne.s32.totalorder %s111, %s127
      %p129 = scmp.eq.s32.totalorder %s23, 0
      %p130 = por %p128, %p129
      %s131 = ssub.s32 %s25, %s32
      %p132 = scmp.eq.s32.totalorder %s131, 0
      %s134 = sadd.s32 %s133, 1
      %s135 = scalar_select %p132, %s133, %s134
      %p138 = pneg %p132
      %p139 = scmp.eq.s32.totalorder %s17, 1
      %p140 = por %p138, %p139
      %p141 = scmp.ne.s32.totalorder %s133, %s136
      %p142 = scmp.eq.s32.totalorder %s17, 0
      %p143 = por %p141, %p142
      %p144 = scmp.ne.s32.totalorder %s133, %s136
      %p145 = scmp.eq.s32.totalorder %s22, 1
      %p146 = por %p144, %p145
      %p147 = scmp.ne.s32.totalorder %s136, %s137
      %p148 = scmp.eq.s32.totalorder %s22, 0
      %p149 = por %p147, %p148
      %p150 = scmp.ne.s32.totalorder %s136, %s137
      %p151 = scmp.eq.s32.totalorder %s23, 1
      %p152 = por %p150, %p151
      %p154 = scmp.ne.s32.totalorder %s137, %s153
      %p155 = scmp.eq.s32.totalorder %s23, 0
      %p156 = por %p154, %p155
      %s158 = sadd.s32 %s157, 1
      %p161 = scmp.eq.s32.totalorder %s17, 1
      %p162 = scmp.ne.s32.totalorder %s157, %s159
      %p163 = scmp.eq.s32.totalorder %s17, 0
      %p164 = por %p162, %p163
      %p165 = scmp.ne.s32.totalorder %s157, %s159
      %p166 = scmp.eq.s32.totalorder %s22, 1
      %p167 = por %p165, %p166
      %p168 = scmp.ne.s32.totalorder %s159, %s160
      %p169 = scmp.eq.s32.totalorder %s22, 0
      %p170 = por %p168, %p169
      %p171 = scmp.ne.s32.totalorder %s159, %s160
      %p172 = scmp.eq.s32.totalorder %s23, 1
      %p173 = por %p171, %p172
      %p175 = scmp.ne.s32.totalorder %s160, %s174
      %p176 = scmp.eq.s32.totalorder %s23, 0
      %p177 = por %p175, %p176
      %s179 = sadd.s32 %s178, 1
      %p182 = scmp.eq.s32.totalorder %s17, 1
      %p183 = scmp.ne.s32.totalorder %s178, %s180
      %p184 = scmp.eq.s32.totalorder %s17, 0
      %p185 = por %p183, %p184
      %p186 = scmp.ne.s32.totalorder %s178, %s180
      %p187 = scmp.eq.s32.totalorder %s22, 1
      %p188 = por %p186, %p187
      %p189 = scmp.ne.s32.totalorder %s180, %s181
      %p190 = scmp.eq.s32.totalorder %s22, 0
      %p191 = por %p189, %p190
      %p192 = scmp.ne.s32.totalorder %s180, %s181
      %p193 = scmp.eq.s32.totalorder %s23, 1
      %p194 = por %p192, %p193
      %p196 = scmp.ne.s32.totalorder %s181, %s195
      %p197 = scmp.eq.s32.totalorder %s23, 0
      %p198 = por %p196, %p197
      %s199 = ssub.s32 %s24, %s36
      %p200 = scmp.eq.s32.totalorder %s199, 0
      %s202 = sadd.s32 %s201, 1
      %s203 = scalar_select %p200, %s201, %s202
      %p206 = pneg %p200
      %p207 = scmp.eq.s32.totalorder %s17, 1
      %p208 = por %p206, %p207
      %p209 = scmp.ne.s32.totalorder %s201, %s204
      %p210 = scmp.eq.s32.totalorder %s17, 0
      %p211 = por %p209, %p210
      %p212 = scmp.ne.s32.totalorder %s201, %s204
      %p213 = scmp.eq.s32.totalorder %s22, 1
      %p214 = por %p212, %p213
      %p215 = scmp.ne.s32.totalorder %s204, %s205
      %p216 = scmp.eq.s32.totalorder %s22, 0
      %p217 = por %p215, %p216
      %p218 = scmp.ne.s32.totalorder %s204, %s205
      %p219 = scmp.eq.s32.totalorder %s23, 1
      %p220 = por %p218, %p219
      %p222 = scmp.ne.s32.totalorder %s205, %s221
      %p223 = scmp.eq.s32.totalorder %s23, 0
      %p224 = por %p222, %p223
      %p225 = scmp.le.s32.totalorder 1, %s17
      %p226 = scmp.lt.s32.totalorder %s17, 3
      %p227 = pnand %p225, %p226
      %p228 = pneg %p227
      // Predicated region
      $region9: #{_fcnn_forward_impl.1} parent=5 // pred_check
        _
      $region10: #{_fcnn_forward_impl.1} parent=5 // pred_check_branch
        %230 = sbr.rel (%p227) target = $region12
      $region11: #{_fcnn_forward_impl.1} parent=5 // pred_region
        %s231 = ssub.s32 %s17, 1
        // Predicated region
        $region13: #{_fcnn_forward_impl.1} parent=11 // pred_check
          %p232 = pneg %p55
        $region14: #{_fcnn_forward_impl.1} parent=11 // pred_check_branch
          %234 = sbr.rel (%p232) target = $region16
        $region15: #{_fcnn_forward_impl.1} parent=11 // pred_region
          %p235 = scmp.lt.s32.totalorder %s26, 0
          %s236 = scalar_select %p235, %s26, 0
          %s237 = smul.addr %s236, 8
          %s238 = scalar_lea.vmem %s0, %s237
        $region16: #{_fcnn_forward_impl.1} parent=11 // pred_fallthru
          _
        // Predicated region
        $region17: #{_fcnn_forward_impl.1} parent=11 // pred_check
          %p239 = pneg %p76
        $region18: #{_fcnn_forward_impl.1} parent=11 // pred_check_branch
          %241 = sbr.rel (%p239) target = $region20
        $region19: #{_fcnn_forward_impl.1} parent=11 // pred_region
          %s243 = ssub.s32 2048, 2048
          %244 = vsyncadd [#allocation4], %s243
          %s245 = sshll.u32 [#allocation3], 4
          %s246 = int_to_ptr.vmem [resolvable:$true] %s245
          %251 = dma.hbm_to_vmem [thread:$0]  %s1, 2048, %s246, [#allocation4], 128, 128, 8
        $region20: #{_fcnn_forward_impl.1} parent=11 // pred_fallthru
          _
        // Predicated region
        $region21: #{_fcnn_forward_impl.1} parent=11 // pred_check
          %p252 = pneg %p97
        $region22: #{_fcnn_forward_impl.1} parent=11 // pred_check_branch
          %254 = sbr.rel (%p252) target = $region24
        $region23: #{_fcnn_forward_impl.1} parent=11 // pred_region
          _
        $region24: #{_fcnn_forward_impl.1} parent=11 // pred_fallthru
          _
        // Predicated region
        $region25: #{_fcnn_forward_impl.1} parent=11 // pred_check
          %p255 = pneg %p170
        $region26: #{_fcnn_forward_impl.1} parent=11 // pred_check_branch
          %257 = sbr.rel (%p255) target = $region28
        $region27: #{_fcnn_forward_impl.1} parent=11 // pred_region
          %s259 = ssub.s32 2048, 2048
          %260 = vsyncadd [#allocation6], %s259
          %s261 = sshll.u32 [#allocation7], 4
          %s262 = int_to_ptr.vmem [resolvable:$true] %s261
          %267 = dma.hbm_to_vmem [thread:$0]  %s5, 2048, %s262, [#allocation6], 128, 128, 8
        $region28: #{_fcnn_forward_impl.1} parent=11 // pred_fallthru
          _
        // Predicated region
        $region29: #{_fcnn_forward_impl.1} parent=11 // pred_check
          %p268 = pneg %p191
        $region30: #{_fcnn_forward_impl.1} parent=11 // pred_check_branch
          %270 = sbr.rel (%p268) target = $region32
        $region31: #{_fcnn_forward_impl.1} parent=11 // pred_region
          _
        $region32: #{_fcnn_forward_impl.1} parent=11 // pred_fallthru
          _
      $region12: #{_fcnn_forward_impl.1} parent=5 // pred_fallthru
        _
      %p271 = scmp.lt.s32.totalorder %s17, 2
      // Predicated region
      $region33: #{_fcnn_forward_impl.1} parent=5 // pred_check
        %p272 = pneg %p271
      $region34: #{_fcnn_forward_impl.1} parent=5 // pred_check_branch
        %274 = sbr.rel (%p272) target = $region36
      $region35: #{_fcnn_forward_impl.1} parent=5 // pred_region
        // Predicated region
        $region37: #{_fcnn_forward_impl.1} parent=35 // pred_check
          %p275 = pneg %p117
        $region38: #{_fcnn_forward_impl.1} parent=35 // pred_check_branch
          %277 = sbr.rel (%p275) target = $region40
        $region39: #{_fcnn_forward_impl.1} parent=35 // pred_region
          %s278 = sand.u32 %s17, 1
          %s279 = scalar_lea.sflag [#allocation6], %s278
          %s280 = sand.u32 %s107, 1
          %s281 = smul.addr %s280, 128
          %s282 = scalar_lea.vmem [#allocation5], %s281
          %s284 = ssub.s32 2048, 2048
          %285 = vsyncadd %s279, %s284
          %s286 = smul.addr %s25, 16
          %s287 = smul.addr %s286, 128
          %s288 = scalar_lea.hbm %s3, %s287
          %s289 = sshll.u32 %s282, 4
          %s290 = int_to_ptr.vmem [resolvable:$true] %s289
          %295 = dma.hbm_to_vmem [thread:$0]  %s288, 2048, %s290, %s279, 128, 128, 8
        $region40: #{_fcnn_forward_impl.1} parent=35 // pred_fallthru
          _
        // Predicated region
        $region41: #{_fcnn_forward_impl.1} parent=35 // pred_check
          %p296 = pneg %p143
        $region42: #{_fcnn_forward_impl.1} parent=35 // pred_check_branch
          %298 = sbr.rel (%p296) target = $region44
        $region43: #{_fcnn_forward_impl.1} parent=35 // pred_region
          %p299 = scmp.lt.s32.totalorder %s25, 1
          %s300 = scalar_select %p299, %s25, 1
          %s301 = scalar_lea.vmem %s4, %s300
        $region44: #{_fcnn_forward_impl.1} parent=35 // pred_fallthru
          _
      $region36: #{_fcnn_forward_impl.1} parent=5 // pred_fallthru
        _
      %p302 = scmp.le.s32.totalorder 1, %s17
      %p303 = scmp.lt.s32.totalorder %s17, 3
      %p304 = pnand %p302, %p303
      %p305 = pneg %p304
      // Predicated region
      $region45: #{_fcnn_forward_impl.1} parent=5 // pred_check
        _
      $region46: #{_fcnn_forward_impl.1} parent=5 // pred_check_branch
        %307 = sbr.rel (%p304) target = $region48
      $region47: #{_fcnn_forward_impl.1} parent=5 // pred_region
        %s308 = ssub.s32 %s17, 1
        // Predicated region
        $region49: #{_fcnn_forward_impl.1} parent=47 // pred_check
          %p309 = pneg %p76
        $region50: #{_fcnn_forward_impl.1} parent=47 // pred_check_branch
          %311 = sbr.rel (%p309) target = $region52
        $region51: #{_fcnn_forward_impl.1} parent=47 // pred_region
          %312 = dma.done [#allocation4], 2048
        $region52: #{_fcnn_forward_impl.1} parent=47 // pred_fallthru
          _
        %s313 = sand.u32 %s22, 1
        %s314 = scalar_lea.sflag [#allocation6], %s313
        %s315 = sand.u32 %s110, 1
        %s316 = smul.addr %s315, 128
        %s317 = scalar_lea.vmem [#allocation5], %s316
        // Predicated region
        $region53: #{_fcnn_forward_impl.1} parent=47 // pred_check
          %p318 = pneg %p123
        $region54: #{_fcnn_forward_impl.1} parent=47 // pred_check_branch
          %320 = sbr.rel (%p318) target = $region56
        $region55: #{_fcnn_forward_impl.1} parent=47 // pred_region
          %321 = dma.done %s314, 2048
        $region56: #{_fcnn_forward_impl.1} parent=47 // pred_fallthru
          _
        // Predicated region
        $region57: #{_fcnn_forward_impl.1} parent=47 // pred_check
          %p322 = pneg %p170
        $region58: #{_fcnn_forward_impl.1} parent=47 // pred_check_branch
          %324 = sbr.rel (%p322) target = $region60
        $region59: #{_fcnn_forward_impl.1} parent=47 // pred_region
          %325 = dma.done [#allocation6], 2048
        $region60: #{_fcnn_forward_impl.1} parent=47 // pred_fallthru
          _
        %p326 = scmp.lt.s32.totalorder %s26, 0
        %s327 = scalar_select %p326, %s26, 0
        %s328 = smul.addr %s327, 8
        %s329 = scalar_lea.vmem %s0, %s328
        %p330 = pneg %p55
        %p331 = pneg %p52
        %p332 = pneg %p76
        %p333 = pneg %p73
        %p334 = pneg %p97
        %p335 = pneg %p94
        %s336 = sand.u32 %s22, 1
        %s337 = scalar_lea.sflag [#allocation6], %s336
        %s338 = sand.u32 %s110, 1
        %s339 = smul.addr %s338, 128
        %s340 = scalar_lea.vmem [#allocation5], %s339
        %p341 = pneg %p123
        %p342 = pneg %p120
        %p343 = scmp.lt.s32.totalorder %s27, 1
        %s344 = scalar_select %p343, %s27, 1
        %s345 = scalar_lea.vmem %s4, %s344
        %p346 = pneg %p149
        %p347 = pneg %p146
        %p348 = pneg %p170
        %p349 = pneg %p167
        %p350 = pneg %p191
        %p351 = pneg %p188
        %p352 = pneg %p217
        %p353 = pneg %p214
        %p354 = scmp.lt.s32.totalorder %s26, 0
        %s355 = scalar_select %p354, %s26, 0
        %s356 = smul.addr %s355, 8
        %s357 = scalar_lea.vmem %s7, %s356
        %p358 = scmp.lt.s32.totalorder %s26, 0
        %s359 = scalar_select %p358, %s26, 0
        %s360 = smul.addr %s359, 8
        %s361 = scalar_lea.vmem %s0, %s360
        %p362 = scmp.lt.s32.totalorder %s27, 1
        %s363 = scalar_select %p362, %s27, 1
        %s364 = scalar_lea.vmem %s4, %s363
        %p365 = scmp.lt.s32.totalorder %s26, 0
        %s366 = scalar_select %p365, %s26, 0
        %s367 = smul.addr %s366, 8
        %s368 = scalar_lea.vmem %s7, %s367
        %p369 = scmp.eq.s32.totalorder %s27, 0
        // Predicated region
        $region61: #{_fcnn_forward_impl.1} parent=47 // pred_check
          %p370 = pneg %p369
        $region62: #{_fcnn_forward_impl.1} parent=47 // pred_check_branch
          %372 = sbr.rel (%p370) target = $region64
        $region63: #{_fcnn_forward_impl.1} parent=47 // pred_region
          %v373 = vld [vmem:[%s361] sm:$0xff]
          %v374 = vld [vmem:[#allocation3] sm:$0xff]
          %v375 = vld [vmem:[#allocation3 + $0x8] sm:$0xff]
          %v376 = vld [vmem:[#allocation3 + $0x10] sm:$0xff]
          %v377 = vld [vmem:[#allocation3 + $0x18] sm:$0xff]
          %v378 = vld [vmem:[#allocation3 + $0x20] sm:$0xff]
          %v379 = vld [vmem:[#allocation3 + $0x28] sm:$0xff]
          %v380 = vld [vmem:[#allocation3 + $0x30] sm:$0xff]
          %v381 = vld [vmem:[#allocation3 + $0x38] sm:$0xff]
          %v382 = vld [vmem:[#allocation3 + $0x40] sm:$0xff]
          %v383 = vld [vmem:[#allocation3 + $0x48] sm:$0xff]
          %v384 = vld [vmem:[#allocation3 + $0x50] sm:$0xff]
          %v385 = vld [vmem:[#allocation3 + $0x58] sm:$0xff]
          %v386 = vld [vmem:[#allocation3 + $0x60] sm:$0xff]
          %v387 = vld [vmem:[#allocation3 + $0x68] sm:$0xff]
          %v388 = vld [vmem:[#allocation3 + $0x70] sm:$0xff]
          %v389 = vld [vmem:[#allocation3 + $0x78] sm:$0xff]
          %v390 = vld [vmem:[%s2] sm:$0x1]
          %v392 = vlaneseq
          %v393 = vshrl.u32 %v392, 7
          %v394 = vsub.s32 0, %v393
          %v395 = vrot.slane %v390, %v394
          %397 = vmatprep.subr.mxu0 0.0
          %398 = vmatpush1.msra.mxu0 %v374
          %399 = vmatprep.subr.mxu0 0.0
          %400 = vmatpush1.msra.mxu0 %v375
          %401 = vmatprep.subr.mxu0 0.0
          %402 = vmatpush1.msra.mxu0 %v376
          %403 = vmatprep.subr.mxu0 0.0
          %404 = vmatpush1.msra.mxu0 %v377
          %405 = vmatprep.subr.mxu0 0.0
          %406 = vmatpush1.msra.mxu0 %v378
          %407 = vmatprep.subr.mxu0 0.0
          %408 = vmatpush1.msra.mxu0 %v379
          %409 = vmatprep.subr.mxu0 0.0
          %410 = vmatpush1.msra.mxu0 %v380
          %411 = vmatprep.subr.mxu0 0.0
          %412 = vmatpush1.msra.mxu0 %v381
          %413 = vmatprep.subr.mxu0 0.0
          %414 = vmatpush1.msra.mxu0 %v382
          %415 = vmatprep.subr.mxu0 0.0
          %416 = vmatpush1.msra.mxu0 %v383
          %417 = vmatprep.subr.mxu0 0.0
          %418 = vmatpush1.msra.mxu0 %v384
          %419 = vmatprep.subr.mxu0 0.0
          %420 = vmatpush1.msra.mxu0 %v385
          %421 = vmatprep.subr.mxu0 0.0
          %422 = vmatpush1.msra.mxu0 %v386
          %423 = vmatprep.subr.mxu0 0.0
          %424 = vmatpush1.msra.mxu0 %v387
          %425 = vmatprep.subr.mxu0 0.0
          %426 = vmatpush1.msra.mxu0 %v388
          %427 = vmatprep.subr.mxu0 0.0
          %428 = vmatpush1.msra.mxu0 %v389
          %429 = vmatprep.subr.mxu0 0.0
          %430 = vmatpush1.msra.mxu0 0.0
          %431 = vmatprep.subr.mxu0 0.0
          %432 = vmatpush1.msra.mxu0 0.0
          %433 = vmatprep.subr.mxu0 0.0
          %434 = vmatpush1.msra.mxu0 0.0
          %435 = vmatprep.subr.mxu0 0.0
          %436 = vmatpush1.msra.mxu0 0.0
          %437 = vmatprep.subr.mxu0 0.0
          %438 = vmatpush1.msra.mxu0 0.0
          %439 = vmatprep.subr.mxu0 0.0
          %440 = vmatpush1.msra.mxu0 0.0
          %441 = vmatprep.subr.mxu0 0.0
          %442 = vmatpush1.msra.mxu0 0.0
          %443 = vmatprep.subr.mxu0 0.0
          %444 = vmatpush1.msra.mxu0 0.0
          %445 = vmatprep.subr.mxu0 0.0
          %446 = vmatpush1.msra.mxu0 0.0
          %447 = vmatprep.subr.mxu0 0.0
          %448 = vmatpush1.msra.mxu0 0.0
          %449 = vmatprep.subr.mxu0 0.0
          %450 = vmatpush1.msra.mxu0 0.0
          %451 = vmatprep.subr.mxu0 0.0
          %452 = vmatpush1.msra.mxu0 0.0
          %453 = vmatprep.subr.mxu0 0.0
          %454 = vmatpush1.msra.mxu0 0.0
          %455 = vmatprep.subr.mxu0 0.0
          %456 = vmatpush1.msra.mxu0 0.0
          %457 = vmatprep.subr.mxu0 0.0
          %458 = vmatpush1.msra.mxu0 0.0
          %459 = vmatprep.subr.mxu0 0.0
          %460 = vmatpush1.msra.mxu0 0.0
          %461 = vmatprep.mubr.f32.mxu0 0.0
          %462 = vmatmul.mubr.f32.gmra.mrb[0].mxu0 %v373
          %v463 = vpop.f32.mrb[0].mxu0
          %v464 = vadd.f32 %v395, %v463
          %v465 = vpop.f32.mrb[0].mxu0
          %466 = vdwg.mxu0
          %467 = vst [vmem:[#allocation2] sm:$0xff] %v464
        $region64: #{_fcnn_forward_impl.1} parent=47 // pred_fallthru
          _
        %v468 = vld [vmem:[#allocation2] sm:$0xff]
        %v469 = vld [vmem:[%s317] sm:$0xff]
        %v470 = vld [vmem:[%s317 + $0x8] sm:$0xff]
        %v471 = vld [vmem:[%s317 + $0x10] sm:$0xff]
        %v472 = vld [vmem:[%s317 + $0x18] sm:$0xff]
        %v473 = vld [vmem:[%s317 + $0x20] sm:$0xff]
        %v474 = vld [vmem:[%s317 + $0x28] sm:$0xff]
        %v475 = vld [vmem:[%s317 + $0x30] sm:$0xff]
        %v476 = vld [vmem:[%s317 + $0x38] sm:$0xff]
        %v477 = vld [vmem:[%s317 + $0x40] sm:$0xff]
        %v478 = vld [vmem:[%s317 + $0x48] sm:$0xff]
        %v479 = vld [vmem:[%s317 + $0x50] sm:$0xff]
        %v480 = vld [vmem:[%s317 + $0x58] sm:$0xff]
        %v481 = vld [vmem:[%s317 + $0x60] sm:$0xff]
        %v482 = vld [vmem:[%s317 + $0x68] sm:$0xff]
        %v483 = vld [vmem:[%s317 + $0x70] sm:$0xff]
        %v484 = vld [vmem:[%s317 + $0x78] sm:$0xff]
        %v485 = vld [vmem:[%s364] sm:$0x1]
        %v487 = vlaneseq
        %v488 = vshrl.u32 %v487, 7
        %v489 = vsub.s32 0, %v488
        %v490 = vrot.slane %v485, %v489
        %492 = vmatprep.subr.mxu0 0.0
        %493 = vmatpush1.msra.mxu0 %v469
        %494 = vmatprep.subr.mxu0 0.0
        %495 = vmatpush1.msra.mxu0 %v470
        %496 = vmatprep.subr.mxu0 0.0
        %497 = vmatpush1.msra.mxu0 %v471
        %498 = vmatprep.subr.mxu0 0.0
        %499 = vmatpush1.msra.mxu0 %v472
        %500 = vmatprep.subr.mxu0 0.0
        %501 = vmatpush1.msra.mxu0 %v473
        %502 = vmatprep.subr.mxu0 0.0
        %503 = vmatpush1.msra.mxu0 %v474
        %504 = vmatprep.subr.mxu0 0.0
        %505 = vmatpush1.msra.mxu0 %v475
        %506 = vmatprep.subr.mxu0 0.0
        %507 = vmatpush1.msra.mxu0 %v476
        %508 = vmatprep.subr.mxu0 0.0
        %509 = vmatpush1.msra.mxu0 %v477
        %510 = vmatprep.subr.mxu0 0.0
        %511 = vmatpush1.msra.mxu0 %v478
        %512 = vmatprep.subr.mxu0 0.0
        %513 = vmatpush1.msra.mxu0 %v479
        %514 = vmatprep.subr.mxu0 0.0
        %515 = vmatpush1.msra.mxu0 %v480
        %516 = vmatprep.subr.mxu0 0.0
        %517 = vmatpush1.msra.mxu0 %v481
        %518 = vmatprep.subr.mxu0 0.0
        %519 = vmatpush1.msra.mxu0 %v482
        %520 = vmatprep.subr.mxu0 0.0
        %521 = vmatpush1.msra.mxu0 %v483
        %522 = vmatprep.subr.mxu0 0.0
        %523 = vmatpush1.msra.mxu0 %v484
        %524 = vmatprep.subr.mxu0 0.0
        %525 = vmatpush1.msra.mxu0 0.0
        %526 = vmatprep.subr.mxu0 0.0
        %527 = vmatpush1.msra.mxu0 0.0
        %528 = vmatprep.subr.mxu0 0.0
        %529 = vmatpush1.msra.mxu0 0.0
        %530 = vmatprep.subr.mxu0 0.0
        %531 = vmatpush1.msra.mxu0 0.0
        %532 = vmatprep.subr.mxu0 0.0
        %533 = vmatpush1.msra.mxu0 0.0
        %534 = vmatprep.subr.mxu0 0.0
        %535 = vmatpush1.msra.mxu0 0.0
        %536 = vmatprep.subr.mxu0 0.0
        %537 = vmatpush1.msra.mxu0 0.0
        %538 = vmatprep.subr.mxu0 0.0
        %539 = vmatpush1.msra.mxu0 0.0
        %540 = vmatprep.subr.mxu0 0.0
        %541 = vmatpush1.msra.mxu0 0.0
        %542 = vmatprep.subr.mxu0 0.0
        %543 = vmatpush1.msra.mxu0 0.0
        %544 = vmatprep.subr.mxu0 0.0
        %545 = vmatpush1.msra.mxu0 0.0
        %546 = vmatprep.subr.mxu0 0.0
        %547 = vmatpush1.msra.mxu0 0.0
        %548 = vmatprep.subr.mxu0 0.0
        %549 = vmatpush1.msra.mxu0 0.0
        %550 = vmatprep.subr.mxu0 0.0
        %551 = vmatpush1.msra.mxu0 0.0
        %552 = vmatprep.subr.mxu0 0.0
        %553 = vmatpush1.msra.mxu0 0.0
        %554 = vmatprep.subr.mxu0 0.0
        %555 = vmatpush1.msra.mxu0 0.0
        %556 = vmatprep.mubr.f32.mxu0 0.0
        %557 = vmatmul.mubr.f32.gmra.mrb[0].mxu0 %v468
        %v558 = vpop.f32.mrb[0].mxu0
        %v559 = vadd.f32 %v490, %v558
        %v560 = vpop.f32.mrb[0].mxu0
        %561 = vdwg.mxu0
        %v562 = vmul.f32 %v559, 0.01
        %v563 = vmax.f32 %v559, %v562
        %564 = vst [vmem:[#allocation2] sm:$0xff] %v563
        %p565 = scmp.eq.s32.totalorder %s27, 1
        // Predicated region
        $region65: #{_fcnn_forward_impl.1} parent=47 // pred_check
          %p566 = pneg %p565
        $region66: #{_fcnn_forward_impl.1} parent=47 // pred_check_branch
          %568 = sbr.rel (%p566) target = $region68
        $region67: #{_fcnn_forward_impl.1} parent=47 // pred_region
          %v569 = vld [vmem:[#allocation2] sm:$0xff]
          %v570 = vld [vmem:[#allocation7] sm:$0xff]
          %v571 = vld [vmem:[#allocation7 + $0x8] sm:$0xff]
          %v572 = vld [vmem:[#allocation7 + $0x10] sm:$0xff]
          %v573 = vld [vmem:[#allocation7 + $0x18] sm:$0xff]
          %v574 = vld [vmem:[#allocation7 + $0x20] sm:$0xff]
          %v575 = vld [vmem:[#allocation7 + $0x28] sm:$0xff]
          %v576 = vld [vmem:[#allocation7 + $0x30] sm:$0xff]
          %v577 = vld [vmem:[#allocation7 + $0x38] sm:$0xff]
          %v578 = vld [vmem:[#allocation7 + $0x40] sm:$0xff]
          %v579 = vld [vmem:[#allocation7 + $0x48] sm:$0xff]
          %v580 = vld [vmem:[#allocation7 + $0x50] sm:$0xff]
          %v581 = vld [vmem:[#allocation7 + $0x58] sm:$0xff]
          %v582 = vld [vmem:[#allocation7 + $0x60] sm:$0xff]
          %v583 = vld [vmem:[#allocation7 + $0x68] sm:$0xff]
          %v584 = vld [vmem:[#allocation7 + $0x70] sm:$0xff]
          %v585 = vld [vmem:[#allocation7 + $0x78] sm:$0xff]
          %v586 = vld [vmem:[%s6] sm:$0x1]
          %v588 = vlaneseq
          %v589 = vshrl.u32 %v588, 7
          %v590 = vsub.s32 0, %v589
          %v591 = vrot.slane %v586, %v590
          %593 = vmatprep.subr.mxu0 0.0
          %594 = vmatpush1.msra.mxu0 %v570
          %595 = vmatprep.subr.mxu0 0.0
          %596 = vmatpush1.msra.mxu0 %v571
          %597 = vmatprep.subr.mxu0 0.0
          %598 = vmatpush1.msra.mxu0 %v572
          %599 = vmatprep.subr.mxu0 0.0
          %600 = vmatpush1.msra.mxu0 %v573
          %601 = vmatprep.subr.mxu0 0.0
          %602 = vmatpush1.msra.mxu0 %v574
          %603 = vmatprep.subr.mxu0 0.0
          %604 = vmatpush1.msra.mxu0 %v575
          %605 = vmatprep.subr.mxu0 0.0
          %606 = vmatpush1.msra.mxu0 %v576
          %607 = vmatprep.subr.mxu0 0.0
          %608 = vmatpush1.msra.mxu0 %v577
          %609 = vmatprep.subr.mxu0 0.0
          %610 = vmatpush1.msra.mxu0 %v578
          %611 = vmatprep.subr.mxu0 0.0
          %612 = vmatpush1.msra.mxu0 %v579
          %613 = vmatprep.subr.mxu0 0.0
          %614 = vmatpush1.msra.mxu0 %v580
          %615 = vmatprep.subr.mxu0 0.0
          %616 = vmatpush1.msra.mxu0 %v581
          %617 = vmatprep.subr.mxu0 0.0
          %618 = vmatpush1.msra.mxu0 %v582
          %619 = vmatprep.subr.mxu0 0.0
          %620 = vmatpush1.msra.mxu0 %v583
          %621 = vmatprep.subr.mxu0 0.0
          %622 = vmatpush1.msra.mxu0 %v584
          %623 = vmatprep.subr.mxu0 0.0
          %624 = vmatpush1.msra.mxu0 %v585
          %625 = vmatprep.subr.mxu0 0.0
          %626 = vmatpush1.msra.mxu0 0.0
          %627 = vmatprep.subr.mxu0 0.0
          %628 = vmatpush1.msra.mxu0 0.0
          %629 = vmatprep.subr.mxu0 0.0
          %630 = vmatpush1.msra.mxu0 0.0
          %631 = vmatprep.subr.mxu0 0.0
          %632 = vmatpush1.msra.mxu0 0.0
          %633 = vmatprep.subr.mxu0 0.0
          %634 = vmatpush1.msra.mxu0 0.0
          %635 = vmatprep.subr.mxu0 0.0
          %636 = vmatpush1.msra.mxu0 0.0
          %637 = vmatprep.subr.mxu0 0.0
          %638 = vmatpush1.msra.mxu0 0.0
          %639 = vmatprep.subr.mxu0 0.0
          %640 = vmatpush1.msra.mxu0 0.0
          %641 = vmatprep.subr.mxu0 0.0
          %642 = vmatpush1.msra.mxu0 0.0
          %643 = vmatprep.subr.mxu0 0.0
          %644 = vmatpush1.msra.mxu0 0.0
          %645 = vmatprep.subr.mxu0 0.0
          %646 = vmatpush1.msra.mxu0 0.0
          %647 = vmatprep.subr.mxu0 0.0
          %648 = vmatpush1.msra.mxu0 0.0
          %649 = vmatprep.subr.mxu0 0.0
          %650 = vmatpush1.msra.mxu0 0.0
          %651 = vmatprep.subr.mxu0 0.0
          %652 = vmatpush1.msra.mxu0 0.0
          %653 = vmatprep.subr.mxu0 0.0
          %654 = vmatpush1.msra.mxu0 0.0
          %655 = vmatprep.subr.mxu0 0.0
          %656 = vmatpush1.msra.mxu0 0.0
          %657 = vmatprep.mubr.f32.mxu0 0.0
          %658 = vmatmul.mubr.f32.gmra.mrb[0].mxu0 %v569
          %v659 = vpop.f32.mrb[0].mxu0
          %v660 = vadd.f32 %v591, %v659
          %v661 = vpop.f32.mrb[0].mxu0
          %662 = vdwg.mxu0
          %663 = vst [vmem:[%s368] sm:$0xff] %v660
        $region68: #{_fcnn_forward_impl.1} parent=47 // pred_fallthru
          _
        %p664 = scmp.lt.s32.totalorder %s26, 0
        %s665 = scalar_select %p664, %s26, 0
        %s666 = smul.addr %s665, 8
        %s667 = scalar_lea.vmem %s7, %s666
        // Predicated region
        $region69: #{_fcnn_forward_impl.1} parent=47 // pred_check
          %p668 = pneg %p214
        $region70: #{_fcnn_forward_impl.1} parent=47 // pred_check_branch
          %670 = sbr.rel (%p668) target = $region72
        $region71: #{_fcnn_forward_impl.1} parent=47 // pred_region
          _
        $region72: #{_fcnn_forward_impl.1} parent=47 // pred_fallthru
          _
        // Predicated region
        $region73: #{_fcnn_forward_impl.1} parent=47 // pred_check
          %p671 = pneg %p214
        $region74: #{_fcnn_forward_impl.1} parent=47 // pred_check_branch
          %673 = sbr.rel (%p671) target = $region76
        $region75: #{_fcnn_forward_impl.1} parent=47 // pred_region
          %p674 = scmp.lt.s32.totalorder %s26, 0
          %s675 = scalar_select %p674, %s26, 0
          %s676 = smul.addr %s675, 8
          %s677 = scalar_lea.vmem %s7, %s676
        $region76: #{_fcnn_forward_impl.1} parent=47 // pred_fallthru
          _
      $region48: #{_fcnn_forward_impl.1} parent=5 // pred_fallthru
        _
      %p678 = scmp.le.s32.totalorder 2, %s17
      // Predicated region
      $region77: #{_fcnn_forward_impl.1} parent=5 // pred_check
        %p679 = pneg %p678
      $region78: #{_fcnn_forward_impl.1} parent=5 // pred_check_branch
        %681 = sbr.rel (%p679) target = $region80
      $region79: #{_fcnn_forward_impl.1} parent=5 // pred_region
        %s682 = ssub.s32 %s17, 2
      $region80: #{_fcnn_forward_impl.1} parent=5 // pred_fallthru
        _
    $region6: #{_fcnn_forward_impl.1} parent=1 // loop_footer
      %s21 = sadd.s32 1, %s17
    $region7: #{_fcnn_forward_impl.1} parent=1 // loop_footer_branch
      %16 = sbr.rel target = $region3
    $region8: #{_fcnn_forward_impl.1} parent=1 // loop_exit
      _
    %683 = vsyncpa [#allocation4], 1
    %s684 = scalar_lea.sflag [#allocation4], 1
    %685 = vsyncpa %s684, 1
    %686 = vsyncpa [#allocation6], 1
    %s687 = scalar_lea.sflag [#allocation6], 1
    %688 = vsyncpa %s687, 1

</llo_original>
